<compile_context>
chip_gen: v7x
topology: tpu7x:2x2x1
jax: 0.10.0
libtpu: 0.0.40
codegen_flags: <defaults>
</compile_context>

<pallas_src>
import jax
import jax.numpy as jnp
import numpy as np
from jax.experimental import pallas as pl
from jax.experimental.pallas import tpu as pltpu

B, C, H, W = 2, 256, 8, 8
S = H * W  # 64 -> fc1 input features


def _head_value_kernel(x_ref, wp_ref, s_ref, o_ref):
    # x_ref : (B*C, S)       f32 VMEM -- pure reshape of the NCHW activation
    # wp_ref: (B, B*C + 128) f32 VMEM
    #           cols [0 : B*C]         = block-diag conv1x1 weight * bn_scale
    #           row 0, cols [B*C:+S]   = fc1 weight, rest zero pad
    # s_ref : (2,)           f32 SMEM -- [conv_bias*bn_scale + bn_shift, fc_bias]
    # o_ref : (1, B)         f32 VMEM -- lane-dense output (one tanh value / batch)
    bc, s = x_ref.shape

    w_blk = wp_ref[:, 0:bc]          # (B, B*C)  tile-aligned static slice
    w2 = wp_ref[0:1, bc:bc + s]      # (1, S)    starts on a 128-lane boundary
    b_eff = s_ref[0]                 # conv bias * bn_scale + bn_shift
    fc_b = s_ref[1]

    # 1x1 conv (+ folded BN) for all batches in ONE MXU matmul:
    # (B, B*C) @ (B*C, S) -> (B, S); result stays in vregs.
    conv = jnp.dot(w_blk, x_ref[...], preferred_element_type=jnp.float32)

    # fused bias + ReLU (VPU, in vregs -- no scratch round trip)
    v = jnp.maximum(conv + b_eff, jnp.float32(0.0))                   # (B, S)

    # fc1, lane-dense result: (1,S) x (B,S) contracted over S -> (1, B)
    out = jax.lax.dot_general(w2, v, (((1,), (1,)), ((), ())),
                              preferred_element_type=jnp.float32)
    o_ref[...] = jnp.tanh(out + fc_b)


def fold_value_head_params(conv_w, conv_b, bn_gamma, bn_beta, bn_mean, bn_var,
                           fc_w, fc_b, batch, eps=1e-5):
    """Fold eval-mode BN into the 1x1 conv and pack all weights/biases.

    Call ONCE (inference parameters are fixed) and reuse the result for every
    forward call, keeping the folding/packing off the dispatch critical path.
    """
    c = conv_w.shape[1]
    s = fc_w.shape[1]
    bn_scale = (bn_gamma / jnp.sqrt(bn_var + eps)).reshape(())
    bn_shift = (bn_beta - bn_mean * bn_scale).reshape(())
    w1_eff = (conv_w.reshape(1, c) * bn_scale).astype(jnp.float32)     # (1, C)
    b_eff = (conv_b.reshape(()) * bn_scale + bn_shift).astype(jnp.float32)

    # Block-diagonal conv weight: row i holds w1_eff in cols [i*C, (i+1)*C).
    w_blk = jnp.kron(jnp.eye(batch, dtype=jnp.float32), w1_eff)        # (B, B*C)

    # fc1 weight in the first S lanes of one extra 128-lane tile; the split
    # point B*C is a multiple of 128, so kernel-side slices stay tile-aligned.
    tail = jnp.zeros((batch, 128), jnp.float32)
    tail = tail.at[0, :s].set(fc_w.reshape(-1).astype(jnp.float32))
    wp = jnp.concatenate([w_blk, tail], axis=1)                        # (B, B*C+128)

    scalars = jnp.stack([b_eff, fc_b.reshape(()).astype(jnp.float32)])  # (2,)
    return wp, scalars


def alpha_chess_head_value(x_nchw, wp, scalars):
    """x_nchw: (B, 256, 8, 8) f32; wp/scalars from fold_value_head_params.

    Returns (B, 1) f32."""
    b, c, h, w = x_nchw.shape
    s = h * w

    # Pure reshape of NCHW (no transpose -> no extra HBM round trip).
    # TODO(synk): the residual-tower producer should ideally emit this
    # activation channel-major (C, B*S) -- or this head should be fused into
    # that producer kernel -- so the conv becomes a lane-dense
    # (1,256)@(256,128) matmul and the 128 KiB HBM round trip disappears.
    x = x_nchw.reshape(b * c, s).astype(jnp.float32)

    # TODO(synk): if B grows, add grid=(pl.cdiv(B, tb),) with
    # dimension_semantics=("parallel",) so both v7x TensorCores run; size tb
    # against v7x's 64 MiB VMEM (32 MiB default scoped limit): double-buffered
    # input blocks cost ~2*tb*C*S*4 bytes, and keep the per-step output
    # block's last dim a multiple of 128 (lane-dense stores).
    cost = pl.CostEstimate(
        flops=2 * b * c * s + 2 * b * s,
        transcendentals=b,
        bytes_accessed=(b * c * s + int(wp.size) + b + 2) * 4,
    )

    out_row = pl.pallas_call(
        _head_value_kernel,
        out_shape=jax.ShapeDtypeStruct((1, b), jnp.float32),
        in_specs=[
            pl.BlockSpec(memory_space=pltpu.VMEM),   # activations (B*C, S)
            pl.BlockSpec(memory_space=pltpu.VMEM),   # packed weights
            pl.BlockSpec(memory_space=pltpu.SMEM),   # fused biases
        ],
        out_specs=pl.BlockSpec(memory_space=pltpu.VMEM),
        cost_estimate=cost,
    )(x, wp, scalars)

    return out_row.reshape(b, 1)


def _reference(x_nchw, conv_w, conv_b, bn_gamma, bn_beta, bn_mean, bn_var,
               fc_w, fc_b, eps=1e-5):
    b = x_nchw.shape[0]
    y = jnp.einsum('bchw,c->bhw', x_nchw, conv_w.reshape(-1)) + conv_b
    scale = bn_gamma / jnp.sqrt(bn_var + eps)
    y = y * scale + (bn_beta - bn_mean * scale)
    y = jnp.maximum(y, 0.0)
    y = y.reshape(b, -1)
    y = y @ fc_w.reshape(-1, 1) + fc_b
    return jnp.tanh(y)


if __name__ == "__main__":
    key = jax.random.PRNGKey(0)
    keys = jax.random.split(key, 8)

    x = jax.random.normal(keys[0], (B, C, H, W), dtype=jnp.float32)

    # Deterministic synthetic parameters (shapes follow the PyTorch module).
    conv_w = jax.random.normal(keys[1], (1, C, 1, 1), dtype=jnp.float32) * 0.05
    conv_b = jax.random.normal(keys[2], (1,), dtype=jnp.float32) * 0.05
    bn_gamma = jnp.ones((1,), jnp.float32) * 0.9
    bn_beta = jnp.ones((1,), jnp.float32) * 0.05
    bn_mean = jnp.ones((1,), jnp.float32) * 0.1      # running_mean (eval mode)
    bn_var = jnp.ones((1,), jnp.float32) * 1.5       # running_var  (eval mode)
    fc_w = jax.random.normal(keys[3], (1, S), dtype=jnp.float32) * 0.1
    fc_b = jax.random.normal(keys[4], (1,), dtype=jnp.float32) * 0.1

    # Fold/pack parameters ONCE (off the per-call path), then run the kernel.
    wp, scalars = fold_value_head_params(conv_w, conv_b, bn_gamma, bn_beta,
                                         bn_mean, bn_var, fc_w, fc_b, batch=B)
    wp, scalars = jax.block_until_ready((wp, scalars))

    out = alpha_chess_head_value(x, wp, scalars)
    out = jax.block_until_ready(out)

    ref = _reference(x, conv_w, conv_b, bn_gamma, bn_beta, bn_mean, bn_var,
                     fc_w, fc_b)
    np.testing.assert_allclose(np.asarray(out), np.asarray(ref),
                               rtol=1e-5, atol=1e-5)
    assert out.shape == (B, 1)
    print("KERNEL_OK")
</pallas_src>

<mosaic_0001>
module attributes {stable_mosaic.version = 11 : i64} {
  func.func @_head_value_kernel(%arg0: memref<512x64xf32, #tpu.memory_space<vmem>>, %arg1: memref<2x640xf32, #tpu.memory_space<vmem>>, %arg2: memref<2xf32, #tpu.memory_space<smem>>, %arg3: memref<1x2xf32, #tpu.memory_space<vmem>>) attributes {dimension_semantics = [], scalar_prefetch = 0 : i64, scratch_operands = 0 : i64, tpu.core_type = #tpu.core_type<tc>} {
    %c0 = arith.constant 0 : index
    %c0_0 = arith.constant 0 : index
    %0 = vector.load %arg1[%c0, %c0_0] : memref<2x640xf32, #tpu.memory_space<vmem>>, vector<2x512xf32>
    %c0_1 = arith.constant 0 : index
    %c512 = arith.constant 512 : index
    %1 = vector.load %arg1[%c0_1, %c512] : memref<2x640xf32, #tpu.memory_space<vmem>>, vector<1x64xf32>
    %c0_2 = arith.constant 0 : index
    %2 = memref.load %arg2[%c0_2] : memref<2xf32, #tpu.memory_space<smem>>
    %c1 = arith.constant 1 : index
    %3 = memref.load %arg2[%c1] : memref<2xf32, #tpu.memory_space<smem>>
    %c0_3 = arith.constant 0 : index
    %c0_4 = arith.constant 0 : index
    %4 = vector.load %arg0[%c0_3, %c0_4] : memref<512x64xf32, #tpu.memory_space<vmem>>, vector<512x64xf32>
    %cst = arith.constant dense<0.000000e+00> : vector<2x64xf32>
    %5 = tpu.matmul %0, %4, %cst {dimension_numbers = #tpu.dot_dimension_numbers<[1], [0], [0], [1], [0, 0, 1, 1], [], []>} : vector<2x512xf32>, vector<512x64xf32>, vector<2x64xf32> -> vector<2x64xf32>
    %6 = vector.broadcast %2 : f32 to vector<2x64xf32>
    %7 = arith.addf %5, %6 : vector<2x64xf32>
    %cst_5 = arith.constant 0.000000e+00 : f32
    %8 = vector.broadcast %cst_5 : f32 to vector<2x64xf32>
    %9 = arith.maximumf %7, %8 : vector<2x64xf32>
    %cst_6 = arith.constant dense<0.000000e+00> : vector<1x2xf32>
    %10 = tpu.matmul %1, %9, %cst_6 {dimension_numbers = #tpu.dot_dimension_numbers<[1], [1], [0], [0], [0, 0, 1, 0], [], []>} : vector<1x64xf32>, vector<2x64xf32>, vector<1x2xf32> -> vector<1x2xf32>
    %11 = vector.broadcast %3 : f32 to vector<1x2xf32>
    %12 = arith.addf %10, %11 : vector<1x2xf32>
    %13 = math.tanh %12 : vector<1x2xf32>
    %c0_7 = arith.constant 0 : index
    %c0_8 = arith.constant 0 : index
    %14 = vector.load %arg3[%c0_7, %c0_8] : memref<1x2xf32, #tpu.memory_space<vmem>>, vector<1x2xf32>
    tpu.vector_store %arg3[%c0_7, %c0_8], %13 {strides = array<i32>} : memref<1x2xf32, #tpu.memory_space<vmem>>, vector<1x2xf32>,
    return
  }
}

</mosaic_0001>

<llo_original>
// kernel: tpu_custom_call.1
$region0: #{tpu_custom_call.1}
  #allocation0 [shape = 'u32[]', space=smem, size = 0x4, offset = 0x4, fixed_abs, tag = 'smem constant byte address 0x4 - core index']
  #allocation1 [shape = 'u32[144,128]{1,0:T(1,128)}', space=vmem, size = 0x12000, scoped, tag = 'internal scratch']
  %s0 = inlined_call_operand.vmem [shape: f32[512,64], index: 0, kind: input, shape index: {}]
  %s1 = inlined_call_operand.vmem [shape: f32[2,640], index: 1, kind: input, shape index: {}]
  %s2 = inlined_call_operand.vmem [shape: f32[2], index: 2, kind: input, shape index: {}]
  %s3 = inlined_call_operand.hbm [shape: f32[1,2], index: 3, kind: output, shape index: {}]
  %s4 = sld [smem:[#allocation0]]
  $region26: #{tpu_custom_call.1} parent=0
    _
  %s6 = ssub.s32 1, %s4
  %s7 = scalar_select 0, %s6, %s4
  $region1: #{tpu_custom_call.1} parent=0
    #allocation2 [shape = 'u8[512]{0}', space=smem, size = 0x200, scoped, tag = 'input window, operand 2, single buffered']
    #allocation3 [shape = 's32[1]{0}', space=sflag, size = 0x4, scoped, tag = 'scoped memory for tpu_custom_call.1']
    #allocation4 [shape = 's32[1]{0}', space=sflag, size = 0x4, scoped, tag = 'scoped memory for tpu_custom_call.1']
    #allocation5 [shape = 'u8[512]{0}', space=vmem, size = 0x400, scoped, tag = 'output window, operand 0, single buffered']
    %8 = vsyncpa [#allocation4], 0
    %9 = vsyncpa [#allocation3], 0
    // Predicated region
    $region2: #{tpu_custom_call.1} parent=1 // pred_check
      _
    $region3: #{tpu_custom_call.1} parent=1 // pred_check_branch
      %11 = sbr.rel (0) target = $region5
    $region4: #{tpu_custom_call.1} parent=1 // pred_region
      _
    $region5: #{tpu_custom_call.1} parent=1 // pred_fallthru
      _
    // Predicated region
    $region6: #{tpu_custom_call.1} parent=1 // pred_check
      _
    $region7: #{tpu_custom_call.1} parent=1 // pred_check_branch
      %13 = sbr.rel (0) target = $region9
    $region8: #{tpu_custom_call.1} parent=1 // pred_region
      _
    $region9: #{tpu_custom_call.1} parent=1 // pred_fallthru
      _
    // Predicated region
    $region10: #{tpu_custom_call.1} parent=1 // pred_check
      _
    $region11: #{tpu_custom_call.1} parent=1 // pred_check_branch
      %15 = sbr.rel (0) target = $region13
    $region12: #{tpu_custom_call.1} parent=1 // pred_region
      %s17 = ssub.s32 16, 16
      %18 = vsyncadd [#allocation4], %s17
      %s20 = sshll.u32 %s2, 4
      %s21 = int_to_ptr.vmem [resolvable:$true] %s20
      %23 = dma.vmem_to_smem %s21, 16, [#allocation2], [#allocation4]
    $region13: #{tpu_custom_call.1} parent=1 // pred_fallthru
      _
    // Predicated region
    $region14: #{tpu_custom_call.1} parent=1 // pred_check
      _
    $region15: #{tpu_custom_call.1} parent=1 // pred_check_branch
      %25 = sbr.rel (0) target = $region17
    $region16: #{tpu_custom_call.1} parent=1 // pred_region
      %26 = dma.done [#allocation4], 16
    $region17: #{tpu_custom_call.1} parent=1 // pred_fallthru
      _
    %27 = sfence
    %v28 = vld [vmem:[%s1] sm:$0xff]
    %v29 = vld [vmem:[%s1 + $0x8] sm:$0x1]
    %s30 = sld [smem:[#allocation2]]
    %s31 = sld [smem:[#allocation2 + $0x1]]
    %v32 = vld [vmem:[%s0] sm:$0xff]
    %v33 = vld [vmem:[%s0 + $0x8] sm:$0xff]
    %v34 = vld [vmem:[%s0 + $0x10] sm:$0xff]
    %v35 = vld [vmem:[%s0 + $0x18] sm:$0xff]
    %v36 = vld [vmem:[%s0 + $0x20] sm:$0xff]
    %v37 = vld [vmem:[%s0 + $0x28] sm:$0xff]
    %v38 = vld [vmem:[%s0 + $0x30] sm:$0xff]
    %v39 = vld [vmem:[%s0 + $0x38] sm:$0xff]
    %v40 = vld [vmem:[%s0 + $0x40] sm:$0xff]
    %v41 = vld [vmem:[%s0 + $0x48] sm:$0xff]
    %v42 = vld [vmem:[%s0 + $0x50] sm:$0xff]
    %v43 = vld [vmem:[%s0 + $0x58] sm:$0xff]
    %v44 = vld [vmem:[%s0 + $0x60] sm:$0xff]
    %v45 = vld [vmem:[%s0 + $0x68] sm:$0xff]
    %v46 = vld [vmem:[%s0 + $0x70] sm:$0xff]
    %v47 = vld [vmem:[%s0 + $0x78] sm:$0xff]
    %v48 = vld [vmem:[%s0 + $0x80] sm:$0xff]
    %v49 = vld [vmem:[%s0 + $0x88] sm:$0xff]
    %v50 = vld [vmem:[%s0 + $0x90] sm:$0xff]
    %v51 = vld [vmem:[%s0 + $0x98] sm:$0xff]
    %v52 = vld [vmem:[%s0 + $0xa0] sm:$0xff]
    %v53 = vld [vmem:[%s0 + $0xa8] sm:$0xff]
    %v54 = vld [vmem:[%s0 + $0xb0] sm:$0xff]
    %v55 = vld [vmem:[%s0 + $0xb8] sm:$0xff]
    %v56 = vld [vmem:[%s0 + $0xc0] sm:$0xff]
    %v57 = vld [vmem:[%s0 + $0xc8] sm:$0xff]
    %v58 = vld [vmem:[%s0 + $0xd0] sm:$0xff]
    %v59 = vld [vmem:[%s0 + $0xd8] sm:$0xff]
    %v60 = vld [vmem:[%s0 + $0xe0] sm:$0xff]
    %v61 = vld [vmem:[%s0 + $0xe8] sm:$0xff]
    %v62 = vld [vmem:[%s0 + $0xf0] sm:$0xff]
    %v63 = vld [vmem:[%s0 + $0xf8] sm:$0xff]
    %v64 = vld [vmem:[%s0 + $0x100] sm:$0xff]
    %v65 = vld [vmem:[%s0 + $0x108] sm:$0xff]
    %v66 = vld [vmem:[%s0 + $0x110] sm:$0xff]
    %v67 = vld [vmem:[%s0 + $0x118] sm:$0xff]
    %v68 = vld [vmem:[%s0 + $0x120] sm:$0xff]
    %v69 = vld [vmem:[%s0 + $0x128] sm:$0xff]
    %v70 = vld [vmem:[%s0 + $0x130] sm:$0xff]
    %v71 = vld [vmem:[%s0 + $0x138] sm:$0xff]
    %v72 = vld [vmem:[%s0 + $0x140] sm:$0xff]
    %v73 = vld [vmem:[%s0 + $0x148] sm:$0xff]
    %v74 = vld [vmem:[%s0 + $0x150] sm:$0xff]
    %v75 = vld [vmem:[%s0 + $0x158] sm:$0xff]
    %v76 = vld [vmem:[%s0 + $0x160] sm:$0xff]
    %v77 = vld [vmem:[%s0 + $0x168] sm:$0xff]
    %v78 = vld [vmem:[%s0 + $0x170] sm:$0xff]
    %v79 = vld [vmem:[%s0 + $0x178] sm:$0xff]
    %v80 = vld [vmem:[%s0 + $0x180] sm:$0xff]
    %v81 = vld [vmem:[%s0 + $0x188] sm:$0xff]
    %v82 = vld [vmem:[%s0 + $0x190] sm:$0xff]
    %v83 = vld [vmem:[%s0 + $0x198] sm:$0xff]
    %v84 = vld [vmem:[%s0 + $0x1a0] sm:$0xff]
    %v85 = vld [vmem:[%s0 + $0x1a8] sm:$0xff]
    %v86 = vld [vmem:[%s0 + $0x1b0] sm:$0xff]
    %v87 = vld [vmem:[%s0 + $0x1b8] sm:$0xff]
    %v88 = vld [vmem:[%s0 + $0x1c0] sm:$0xff]
    %v89 = vld [vmem:[%s0 + $0x1c8] sm:$0xff]
    %v90 = vld [vmem:[%s0 + $0x1d0] sm:$0xff]
    %v91 = vld [vmem:[%s0 + $0x1d8] sm:$0xff]
    %v92 = vld [vmem:[%s0 + $0x1e0] sm:$0xff]
    %v93 = vld [vmem:[%s0 + $0x1e8] sm:$0xff]
    %v94 = vld [vmem:[%s0 + $0x1f0] sm:$0xff]
    %v95 = vld [vmem:[%s0 + $0x1f8] sm:$0xff]
    %v96 = vstv %s30
    %v98 = vcombine.high %v28, %v28
    %v100 = vunpack.c.l.s4 1983009808
    %v101 = vunpack.c.0.s8 %v100
    %v102 = vlaneseq
    %v103 = vshrl.u32 %v102, 7
    %v104 = vsub.s32 %v101, %v103
    %v105 = vrot.slane %v28, %v104
    %v107 = vunpack.c.l.s4 1983009808
    %v108 = vunpack.c.0.s8 %v107
    %v109 = vlaneseq
    %v110 = vshrl.u32 %v109, 7
    %v111 = vsub.s32 %v108, %v110
    %v112 = vrot.slane %v98, %v111
    %v113 = vcombine.high %v105, %v105
    %v114 = vcombine.high %v112, %v112
    %119 = vmatprep.subr.mxu0 0.0
    %120 = vmatpush1.msra.mxu0 %v32
    %121 = vmatprep.subr.mxu0 0.0
    %122 = vmatpush1.msra.mxu0 %v33
    %123 = vmatprep.subr.mxu0 0.0
    %124 = vmatpush1.msra.mxu0 %v34
    %125 = vmatprep.subr.mxu0 0.0
    %126 = vmatpush1.msra.mxu0 %v35
    %127 = vmatprep.subr.mxu0 0.0
    %128 = vmatpush1.msra.mxu0 %v36
    %129 = vmatprep.subr.mxu0 0.0
    %130 = vmatpush1.msra.mxu0 %v37
    %131 = vmatprep.subr.mxu0 0.0
    %132 = vmatpush1.msra.mxu0 %v38
    %133 = vmatprep.subr.mxu0 0.0
    %134 = vmatpush1.msra.mxu0 %v39
    %135 = vmatprep.subr.mxu0 0.0
    %136 = vmatpush1.msra.mxu0 %v40
    %137 = vmatprep.subr.mxu0 0.0
    %138 = vmatpush1.msra.mxu0 %v41
    %139 = vmatprep.subr.mxu0 0.0
    %140 = vmatpush1.msra.mxu0 %v42
    %141 = vmatprep.subr.mxu0 0.0
    %142 = vmatpush1.msra.mxu0 %v43
    %143 = vmatprep.subr.mxu0 0.0
    %144 = vmatpush1.msra.mxu0 %v44
    %145 = vmatprep.subr.mxu0 0.0
    %146 = vmatpush1.msra.mxu0 %v45
    %147 = vmatprep.subr.mxu0 0.0
    %148 = vmatpush1.msra.mxu0 %v46
    %149 = vmatprep.subr.mxu0 0.0
    %150 = vmatpush1.msra.mxu0 %v47
    %151 = vmatprep.subr.mxu0 0.0
    %152 = vmatpush1.msra.mxu0 %v48
    %153 = vmatprep.subr.mxu0 0.0
    %154 = vmatpush1.msra.mxu0 %v49
    %155 = vmatprep.subr.mxu0 0.0
    %156 = vmatpush1.msra.mxu0 %v50
    %157 = vmatprep.subr.mxu0 0.0
    %158 = vmatpush1.msra.mxu0 %v51
    %159 = vmatprep.subr.mxu0 0.0
    %160 = vmatpush1.msra.mxu0 %v52
    %161 = vmatprep.subr.mxu0 0.0
    %162 = vmatpush1.msra.mxu0 %v53
    %163 = vmatprep.subr.mxu0 0.0
    %164 = vmatpush1.msra.mxu0 %v54
    %165 = vmatprep.subr.mxu0 0.0
    %166 = vmatpush1.msra.mxu0 %v55
    %167 = vmatprep.subr.mxu0 0.0
    %168 = vmatpush1.msra.mxu0 %v56
    %169 = vmatprep.subr.mxu0 0.0
    %170 = vmatpush1.msra.mxu0 %v57
    %171 = vmatprep.subr.mxu0 0.0
    %172 = vmatpush1.msra.mxu0 %v58
    %173 = vmatprep.subr.mxu0 0.0
    %174 = vmatpush1.msra.mxu0 %v59
    %175 = vmatprep.subr.mxu0 0.0
    %176 = vmatpush1.msra.mxu0 %v60
    %177 = vmatprep.subr.mxu0 0.0
    %178 = vmatpush1.msra.mxu0 %v61
    %179 = vmatprep.subr.mxu0 0.0
    %180 = vmatpush1.msra.mxu0 %v62
    %181 = vmatprep.subr.mxu0 0.0
    %182 = vmatpush1.msra.mxu0 %v63
    %183 = vmatprep.mubr.f32.mxu0 %v113
    %184 = vmatmul.mubr.f32.gmra.mrb[0].mxu0 %v105
    %v185 = vpop.f32.mrb[0].mxu0
    %v186 = vadd.f32 %v96, %v185
    %v187 = vpop.f32.mrb[0].mxu0
    %188 = vdwg.mxu0
    %189 = vmatprep.subr.mxu0 0.0
    %190 = vmatpush1.msra.mxu0 %v64
    %191 = vmatprep.subr.mxu0 0.0
    %192 = vmatpush1.msra.mxu0 %v65
    %193 = vmatprep.subr.mxu0 0.0
    %194 = vmatpush1.msra.mxu0 %v66
    %195 = vmatprep.subr.mxu0 0.0
    %196 = vmatpush1.msra.mxu0 %v67
    %197 = vmatprep.subr.mxu0 0.0
    %198 = vmatpush1.msra.mxu0 %v68
    %199 = vmatprep.subr.mxu0 0.0
    %200 = vmatpush1.msra.mxu0 %v69
    %201 = vmatprep.subr.mxu0 0.0
    %202 = vmatpush1.msra.mxu0 %v70
    %203 = vmatprep.subr.mxu0 0.0
    %204 = vmatpush1.msra.mxu0 %v71
    %205 = vmatprep.subr.mxu0 0.0
    %206 = vmatpush1.msra.mxu0 %v72
    %207 = vmatprep.subr.mxu0 0.0
    %208 = vmatpush1.msra.mxu0 %v73
    %209 = vmatprep.subr.mxu0 0.0
    %210 = vmatpush1.msra.mxu0 %v74
    %211 = vmatprep.subr.mxu0 0.0
    %212 = vmatpush1.msra.mxu0 %v75
    %213 = vmatprep.subr.mxu0 0.0
    %214 = vmatpush1.msra.mxu0 %v76
    %215 = vmatprep.subr.mxu0 0.0
    %216 = vmatpush1.msra.mxu0 %v77
    %217 = vmatprep.subr.mxu0 0.0
    %218 = vmatpush1.msra.mxu0 %v78
    %219 = vmatprep.subr.mxu0 0.0
    %220 = vmatpush1.msra.mxu0 %v79
    %221 = vmatprep.subr.mxu0 0.0
    %222 = vmatpush1.msra.mxu0 %v80
    %223 = vmatprep.subr.mxu0 0.0
    %224 = vmatpush1.msra.mxu0 %v81
    %225 = vmatprep.subr.mxu0 0.0
    %226 = vmatpush1.msra.mxu0 %v82
    %227 = vmatprep.subr.mxu0 0.0
    %228 = vmatpush1.msra.mxu0 %v83
    %229 = vmatprep.subr.mxu0 0.0
    %230 = vmatpush1.msra.mxu0 %v84
    %231 = vmatprep.subr.mxu0 0.0
    %232 = vmatpush1.msra.mxu0 %v85
    %233 = vmatprep.subr.mxu0 0.0
    %234 = vmatpush1.msra.mxu0 %v86
    %235 = vmatprep.subr.mxu0 0.0
    %236 = vmatpush1.msra.mxu0 %v87
    %237 = vmatprep.subr.mxu0 0.0
    %238 = vmatpush1.msra.mxu0 %v88
    %239 = vmatprep.subr.mxu0 0.0
    %240 = vmatpush1.msra.mxu0 %v89
    %241 = vmatprep.subr.mxu0 0.0
    %242 = vmatpush1.msra.mxu0 %v90
    %243 = vmatprep.subr.mxu0 0.0
    %244 = vmatpush1.msra.mxu0 %v91
    %245 = vmatprep.subr.mxu0 0.0
    %246 = vmatpush1.msra.mxu0 %v92
    %247 = vmatprep.subr.mxu0 0.0
    %248 = vmatpush1.msra.mxu0 %v93
    %249 = vmatprep.subr.mxu0 0.0
    %250 = vmatpush1.msra.mxu0 %v94
    %251 = vmatprep.subr.mxu0 0.0
    %252 = vmatpush1.msra.mxu0 %v95
    %253 = vmatprep.mubr.f32.mxu0 %v114
    %254 = vmatmul.mubr.f32.gmra.mrb[0].mxu0 %v112
    %v255 = vpop.f32.mrb[0].mxu0
    %v256 = vadd.f32 %v186, %v255
    %v257 = vpop.f32.mrb[0].mxu0
    %258 = vdwg.mxu0
    %v259 = vmax.f32 %v256, 0.0
    %v260 = vstv %s31
    %vm261 = vcmask 523264
    %v263 = vsel %vm261, %v29, 0
    %v266 = vsel %vm261, %v259, 0
    %268 = vmatprep.subr.mxu0 0.0
    %269 = vmatpush1.xpose.msra.mxu0 %v266
    %270 = vmatprep.subr.mxu0 0.0
    %271 = vmatpush1.xpose.msra.mxu0 0.0
    %272 = vmatprep.subr.mxu0 0.0
    %273 = vmatpush1.xpose.msra.mxu0 0.0
    %274 = vmatprep.subr.mxu0 0.0
    %275 = vmatpush1.xpose.msra.mxu0 0.0
    %276 = vmatprep.subr.mxu0 0.0
    %277 = vmatpush1.xpose.msra.mxu0 0.0
    %278 = vmatprep.subr.mxu0 0.0
    %279 = vmatpush1.xpose.msra.mxu0 0.0
    %280 = vmatprep.subr.mxu0 0.0
    %281 = vmatpush1.xpose.msra.mxu0 0.0
    %282 = vmatprep.subr.mxu0 0.0
    %283 = vmatpush1.xpose.msra.mxu0 0.0
    %284 = vmatprep.subr.mxu0 0.0
    %285 = vmatpush1.xpose.msra.mxu0 0.0
    %286 = vmatprep.subr.mxu0 0.0
    %287 = vmatpush1.xpose.msra.mxu0 0.0
    %288 = vmatprep.subr.mxu0 0.0
    %289 = vmatpush1.xpose.msra.mxu0 0.0
    %290 = vmatprep.subr.mxu0 0.0
    %291 = vmatpush1.xpose.msra.mxu0 0.0
    %292 = vmatprep.subr.mxu0 0.0
    %293 = vmatpush1.xpose.msra.mxu0 0.0
    %294 = vmatprep.subr.mxu0 0.0
    %295 = vmatpush1.xpose.msra.mxu0 0.0
    %296 = vmatprep.subr.mxu0 0.0
    %297 = vmatpush1.xpose.msra.mxu0 0.0
    %298 = vmatprep.subr.mxu0 0.0
    %299 = vmatpush1.xpose.msra.mxu0 0.0
    %300 = vmatprep.subr.mxu0 0.0
    %301 = vmatpush1.xpose.msra.mxu0 0.0
    %302 = vmatprep.subr.mxu0 0.0
    %303 = vmatpush1.xpose.msra.mxu0 0.0
    %304 = vmatprep.subr.mxu0 0.0
    %305 = vmatpush1.xpose.msra.mxu0 0.0
    %306 = vmatprep.subr.mxu0 0.0
    %307 = vmatpush1.xpose.msra.mxu0 0.0
    %308 = vmatprep.subr.mxu0 0.0
    %309 = vmatpush1.xpose.msra.mxu0 0.0
    %310 = vmatprep.subr.mxu0 0.0
    %311 = vmatpush1.xpose.msra.mxu0 0.0
    %312 = vmatprep.subr.mxu0 0.0
    %313 = vmatpush1.xpose.msra.mxu0 0.0
    %314 = vmatprep.subr.mxu0 0.0
    %315 = vmatpush1.xpose.msra.mxu0 0.0
    %316 = vmatprep.subr.mxu0 0.0
    %317 = vmatpush1.xpose.msra.mxu0 0.0
    %318 = vmatprep.subr.mxu0 0.0
    %319 = vmatpush1.xpose.msra.mxu0 0.0
    %320 = vmatprep.subr.mxu0 0.0
    %321 = vmatpush1.xpose.msra.mxu0 0.0
    %322 = vmatprep.subr.mxu0 0.0
    %323 = vmatpush1.xpose.msra.mxu0 0.0
    %324 = vmatprep.subr.mxu0 0.0
    %325 = vmatpush1.xpose.msra.mxu0 0.0
    %326 = vmatprep.subr.mxu0 0.0
    %327 = vmatpush1.xpose.msra.mxu0 0.0
    %328 = vmatprep.subr.mxu0 0.0
    %329 = vmatpush1.xpose.msra.mxu0 0.0
    %330 = vmatprep.subr.mxu0 0.0
    %331 = vmatpush1.xpose.msra.mxu0 0.0
    %332 = vmatprep.mubr.f32.mxu0 0.0
    %333 = vmatmul.mubr.f32.gmra.mrb[0].mxu0 %v263
    %v334 = vpop.f32.mrb[0].mxu0
    %v335 = vadd.f32 %v260, %v334
    %v336 = vpop.f32.mrb[0].mxu0
    %337 = vdwg.mxu0
    %v338 = vtanh.pop %v335
    %vm339 = vcmask 8192
    %340 = vst.msk [vmem:[#allocation5] sm:$0x1] %vm339, %v338
    // Predicated region
    $region18: #{tpu_custom_call.1} parent=1 // pred_check
      _
    $region19: #{tpu_custom_call.1} parent=1 // pred_check_branch
      %342 = sbr.rel (0) target = $region21
    $region20: #{tpu_custom_call.1} parent=1 // pred_region
      %s344 = ssub.s32 16, 16
      %345 = vsyncadd [#allocation3], %s344
      %s347 = sshll.u32 [#allocation5], 4
      %s348 = int_to_ptr.vmem [resolvable:$true] %s347
      %350 = dma.vmem_to_hbm [thread:$0]  %s348, 16, %s3, [#allocation3]
    $region21: #{tpu_custom_call.1} parent=1 // pred_fallthru
      _
    // Predicated region
    $region22: #{tpu_custom_call.1} parent=1 // pred_check
      _
    $region23: #{tpu_custom_call.1} parent=1 // pred_check_branch
      %352 = sbr.rel (0) target = $region25
    $region24: #{tpu_custom_call.1} parent=1 // pred_region
      %353 = dma.done [#allocation3], 16
    $region25: #{tpu_custom_call.1} parent=1 // pred_fallthru
      _
    %354 = vsyncpa [#allocation3], 1
    %355 = vsyncpa [#allocation4], 1

</llo_original>
